<compile_context>
chip_gen: v7x
topology: tpu7x:2x2x1
jax: 0.10.0
libtpu: 0.0.40
codegen_flags: <defaults>
</compile_context>

<pallas_src>
import functools

import jax
import jax.numpy as jnp
import numpy as np
from jax.experimental import pallas as pl
from jax.experimental.pallas import tpu as pltpu

_LANES = 128
_MAX_BLOCK_ROWS = 8192   # 8192 * 128 * 4 B = 4 MiB per f32 buffer
_NUM_PARTS = 2           # leading "parallel" axis -> uses both TCs on v7x


def _wloss_kernel(x_ref, y_ref, partial_ref, acc_ref, *, block_rows):
    b = pl.program_id(1)

    @pl.when(b == 0)
    def _init():
        acc_ref[...] = jnp.zeros_like(acc_ref)

    # VPU multiply in f32 (explicit upcast; f32 accumulation avoids bf16 drift).
    prod = x_ref[...].astype(jnp.float32) * y_ref[...].astype(jnp.float32)
    # Sublane-aligned partial reduce into the resident (8, 128) accumulator.
    # The final cross-sublane/cross-lane reduce + 1/N scale happens once, outside.
    acc_ref[...] += prod.reshape(block_rows // 8, 8, _LANES).sum(axis=0)

    @pl.when(b == pl.num_programs(1) - 1)
    def _finalize():
        partial_ref[...] = acc_ref[...]


def _round_up(x, m):
    return ((x + m - 1) // m) * m


@jax.jit
def wasserstein_loss(output, target):
    assert output.shape == target.shape
    n = output.size                       # true element count for the mean
    x = output.reshape(-1)
    y = target.reshape(-1)

    rows = pl.cdiv(n, _LANES)
    block_rows = min(_MAX_BLOCK_ROWS, _round_up(pl.cdiv(rows, _NUM_PARTS), 8))
    blocks_per_part = pl.cdiv(rows, _NUM_PARTS * block_rows)
    rows_per_part = blocks_per_part * block_rows
    padded = _NUM_PARTS * rows_per_part * _LANES

    if padded != n:
        # Zero padding leaves the product-sum unchanged; mean divides by true n.
        x = jnp.pad(x, (0, padded - n))
        y = jnp.pad(y, (0, padded - n))

    x3 = x.reshape(_NUM_PARTS, rows_per_part, _LANES)
    y3 = y.reshape(_NUM_PARTS, rows_per_part, _LANES)

    bytes_per_block = block_rows * _LANES * jnp.dtype(output.dtype).itemsize
    # 2 inputs x 2 pipeline buffers + headroom; clamp to [16 MiB, 48 MiB] so it is
    # above v5e's scoped default yet well under v7x's 64 MiB physical VMEM.
    vmem_limit = max(min(4 * int(bytes_per_block) + (16 << 20), 48 << 20), 16 << 20)

    partials = pl.pallas_call(
        functools.partial(_wloss_kernel, block_rows=block_rows),
        out_shape=jax.ShapeDtypeStruct((_NUM_PARTS, 8, _LANES), jnp.float32),
        grid=(_NUM_PARTS, blocks_per_part),
        in_specs=[
            pl.BlockSpec((None, block_rows, _LANES), lambda p, b: (p, b, 0)),
            pl.BlockSpec((None, block_rows, _LANES), lambda p, b: (p, b, 0)),
        ],
        out_specs=pl.BlockSpec((None, 8, _LANES), lambda p, b: (p, 0, 0)),
        scratch_shapes=[pltpu.VMEM((8, _LANES), jnp.float32)],
        compiler_params=pltpu.CompilerParams(
            dimension_semantics=("parallel", "arbitrary"),
            vmem_limit_bytes=vmem_limit,
        ),
    )(x3, y3)

    # Final cross-part / cross-sublane / cross-lane reduce and single 1/N scale.
    return partials.sum() / jnp.float32(n)


if __name__ == "__main__":
    key = jax.random.PRNGKey(0)
    k1, k2 = jax.random.split(key)
    shape = (2, 4, 16, 16)  # B, C, H, W
    output = jax.random.normal(k1, shape, dtype=jnp.float32)
    target = jax.random.normal(k2, shape, dtype=jnp.float32)

    loss = jax.block_until_ready(wasserstein_loss(output, target))

    ref = jnp.mean(output * target)
    np.testing.assert_allclose(np.asarray(loss), np.asarray(ref), rtol=1e-5, atol=1e-6)
    print("KERNEL_OK")
</pallas_src>

<mosaic_0001>
module attributes {stable_mosaic.version = 11 : i64} {
  func.func @_wloss_kernel(%arg0: i32, %arg1: i32, %arg2: memref<1x8x128xf32, #tpu.memory_space<vmem>>, %arg3: memref<1x8x128xf32, #tpu.memory_space<vmem>>, %arg4: memref<1x8x128xf32, #tpu.memory_space<vmem>>, %arg5: memref<8x128xf32, #tpu.memory_space<vmem>>) attributes {dimension_semantics = [#tpu.dimension_semantics<parallel>, #tpu.dimension_semantics<arbitrary>], iteration_bounds = array<i64: 2, 1>, scalar_prefetch = 0 : i64, scratch_operands = 1 : i64, tpu.core_type = #tpu.core_type<tc>, window_params = [{transform_indices = @transform_0, window_bounds = array<i64: 1, 8, 128>}, {transform_indices = @transform_1, window_bounds = array<i64: 1, 8, 128>}, {transform_indices = @transform_2, window_bounds = array<i64: 1, 8, 128>}]} {
    %c0_i32 = arith.constant 0 : i32
    %0 = arith.cmpi eq, %arg1, %c0_i32 : i32
    %1 = arith.extui %0 : i1 to i32
    %c0_i32_0 = arith.constant 0 : i32
    %2 = arith.cmpi ne, %1, %c0_i32_0 : i32
    scf.if %2 {
      %cst_12 = arith.constant 0.000000e+00 : f32
      %16 = vector.broadcast %cst_12 : f32 to vector<8x128xf32>
      %c0_13 = arith.constant 0 : index
      %c0_14 = arith.constant 0 : index
      %17 = vector.load %arg5[%c0_13, %c0_14] : memref<8x128xf32, #tpu.memory_space<vmem>>, vector<8x128xf32>
      tpu.vector_store %arg5[%c0_13, %c0_14], %16 {strides = array<i32>} : memref<8x128xf32, #tpu.memory_space<vmem>>, vector<8x128xf32>,
    } else {
    }
    %c0 = arith.constant 0 : index
    %c0_1 = arith.constant 0 : index
    %c0_2 = arith.constant 0 : index
    %3 = vector.load %arg2[%c0, %c0_1, %c0_2] : memref<1x8x128xf32, #tpu.memory_space<vmem>>, vector<1x8x128xf32>
    %4 = vector.shape_cast %3 : vector<1x8x128xf32> to vector<8x128xf32>
    %c0_3 = arith.constant 0 : index
    %c0_4 = arith.constant 0 : index
    %c0_5 = arith.constant 0 : index
    %5 = vector.load %arg3[%c0_3, %c0_4, %c0_5] : memref<1x8x128xf32, #tpu.memory_space<vmem>>, vector<1x8x128xf32>
    %6 = vector.shape_cast %5 : vector<1x8x128xf32> to vector<8x128xf32>
    %7 = arith.mulf %4, %6 : vector<8x128xf32>
    %c0_6 = arith.constant 0 : index
    %c0_7 = arith.constant 0 : index
    %8 = vector.load %arg5[%c0_6, %c0_7] : memref<8x128xf32, #tpu.memory_space<vmem>>, vector<8x128xf32>
    %9 = vector.shape_cast %7 : vector<8x128xf32> to vector<1x8x128xf32>
    %cst = arith.constant dense<0.000000e+00> : vector<8x128xf32>
    %10 = vector.multi_reduction <add>, %9, %cst [0] : vector<1x8x128xf32> to vector<8x128xf32>
    %11 = arith.addf %8, %10 : vector<8x128xf32>
    %c0_8 = arith.constant 0 : index
    %c0_9 = arith.constant 0 : index
    %12 = vector.load %arg5[%c0_8, %c0_9] : memref<8x128xf32, #tpu.memory_space<vmem>>, vector<8x128xf32>
    tpu.vector_store %arg5[%c0_8, %c0_9], %11 {strides = array<i32>} : memref<8x128xf32, #tpu.memory_space<vmem>>, vector<8x128xf32>,
    %c0_i32_10 = arith.constant 0 : i32
    %13 = arith.cmpi eq, %arg1, %c0_i32_10 : i32
    %14 = arith.extui %13 : i1 to i32
    %c0_i32_11 = arith.constant 0 : i32
    %15 = arith.cmpi ne, %14, %c0_i32_11 : i32
    scf.if %15 {
      %c0_12 = arith.constant 0 : index
      %c0_13 = arith.constant 0 : index
      %16 = vector.load %arg5[%c0_12, %c0_13] : memref<8x128xf32, #tpu.memory_space<vmem>>, vector<8x128xf32>
      %c0_14 = arith.constant 0 : index
      %c0_15 = arith.constant 0 : index
      %c0_16 = arith.constant 0 : index
      %17 = vector.load %arg4[%c0_14, %c0_15, %c0_16] : memref<1x8x128xf32, #tpu.memory_space<vmem>>, vector<1x8x128xf32>
      %18 = vector.shape_cast %17 : vector<1x8x128xf32> to vector<8x128xf32>
      %19 = vector.shape_cast %16 : vector<8x128xf32> to vector<1x8x128xf32>
      tpu.vector_store %arg4[%c0_14, %c0_15, %c0_16], %19 {strides = array<i32>} : memref<1x8x128xf32, #tpu.memory_space<vmem>>, vector<1x8x128xf32>,
    } else {
    }
    return
  }
  func.func @transform_0(%arg0: i32, %arg1: i32) -> (i32, i32, i32) {
    %c0_i32 = arith.constant 0 : i32
    %c0_i32_0 = arith.constant 0 : i32
    return %arg0, %arg1, %c0_i32 : i32, i32, i32
  }
  func.func @transform_1(%arg0: i32, %arg1: i32) -> (i32, i32, i32) {
    %c0_i32 = arith.constant 0 : i32
    %c0_i32_0 = arith.constant 0 : i32
    return %arg0, %arg1, %c0_i32 : i32, i32, i32
  }
  func.func @transform_2(%arg0: i32, %arg1: i32) -> (i32, i32, i32) {
    %c0_i32 = arith.constant 0 : i32
    %c0_i32_0 = arith.constant 0 : i32
    %c0_i32_1 = arith.constant 0 : i32
    return %arg0, %c0_i32, %c0_i32_0 : i32, i32, i32
  }
}

</mosaic_0001>

<llo_original>
// kernel: wasserstein_loss.1
$region0: #{wasserstein_loss.1}
  #allocation0 [shape = 'u32[]', space=smem, size = 0x4, offset = 0x4, fixed_abs, tag = 'smem constant byte address 0x4 - core index']
  #allocation1 [shape = 'u32[144,128]{1,0:T(1,128)}', space=vmem, size = 0x12000, scoped, tag = 'internal scratch']
  #allocation2 [shape = 'f32[8,128]{1,0:T(8,128)}', space=vmem, size = 0x1000, scoped, tag = 'scratch operand']
  %s0 = inlined_call_operand.vmem [shape: f32[2,8,128], index: 0, kind: input, shape index: {}]
  %s1 = inlined_call_operand.vmem [shape: f32[2,8,128], index: 1, kind: input, shape index: {}]
  %s2 = inlined_call_operand.vmem [shape: f32[2,8,128], index: 2, kind: output, shape index: {}]
  %s3 = sld [smem:[#allocation0]]
  $region49: #{wasserstein_loss.1} parent=0
    _
  %s5 = ssub.s32 1, %s3
  %s6 = scalar_select 0, %s5, %s3
  loop: start=0, step=1, limit=4
  $region2: #{wasserstein_loss.1} parent=0 // loop_pre_header
    _
  $region3: #{wasserstein_loss.1} parent=0 // loop_header
    %s8 = sphi 0, %s12
    %p9 = scmp.ge.s32.totalorder %s8, 4
    %s15 = sphi 0, %s27
    %s16 = sphi 0, %s23
    %s17 = sphi 0, %s15
    %s18 = sphi 0, %s16
    %s19 = sphi 0, %s17
    %s20 = sphi 0, %s18
    %s32 = sphi 0, %s34
    %s35 = sphi 0, %s32
    %s36 = sphi 0, %s35
    %s52 = sphi 0, %s36
    %s60 = sphi 0, %s62
    %s63 = sphi 0, %s60
    %s64 = sphi 0, %s63
    %s80 = sphi 0, %s64
    %s86 = sphi 0, %s88
    %s89 = sphi 0, %s86
    %s90 = sphi 0, %s89
    %s106 = sphi 0, %s90
  $region4: #{wasserstein_loss.1} parent=0 // loop_header_branch
    %11 = sbr.rel (%p9) target = $region8
  $region5: #{wasserstein_loss.1} parent=0 // loop_body
    %s13 = ssub.s32 %s8, 1
    %s14 = ssub.s32 %s8, 2
    %s21 = sadd.s32 1, %s16
    %p22 = scmp.ge.s32.totalorder %s21, 1
    %s23 = scalar_select %p22, 0, %s21
    %s24 = sadd.s32 1, %s15
    %s25 = scalar_select %p22, %s24, %s15
    %p26 = scmp.ge.s32.totalorder %s25, 2
    %s27 = scalar_select %p26, 0, %s25
    %s28 = ssub.s32 %s15, %s27
    %s29 = ssub.s32 %s16, %s23
    %s30 = sor.u32 %s28, %s29
    %p31 = scmp.eq.s32.totalorder %s30, 0
    %s33 = sadd.s32 %s32, 1
    %s34 = scalar_select %p31, %s32, %s33
    %p37 = pneg %p31
    %p38 = scmp.eq.s32.totalorder %s8, 1
    %p39 = por %p37, %p38
    %p40 = scmp.ne.s32.totalorder %s32, %s35
    %p41 = scmp.eq.s32.totalorder %s8, 0
    %p42 = por %p40, %p41
    %p43 = scmp.ne.s32.totalorder %s32, %s35
    %p44 = scmp.eq.s32.totalorder %s13, 1
    %p45 = por %p43, %p44
    %p46 = scmp.ne.s32.totalorder %s35, %s36
    %p47 = scmp.eq.s32.totalorder %s13, 0
    %p48 = por %p46, %p47
    %p49 = scmp.ne.s32.totalorder %s35, %s36
    %p50 = scmp.eq.s32.totalorder %s14, 1
    %p51 = por %p49, %p50
    %p53 = scmp.ne.s32.totalorder %s36, %s52
    %p54 = scmp.eq.s32.totalorder %s14, 0
    %p55 = por %p53, %p54
    %s56 = ssub.s32 %s15, %s27
    %s57 = ssub.s32 %s16, %s23
    %s58 = sor.u32 %s56, %s57
    %p59 = scmp.eq.s32.totalorder %s58, 0
    %s61 = sadd.s32 %s60, 1
    %s62 = scalar_select %p59, %s60, %s61
    %p65 = pneg %p59
    %p66 = scmp.eq.s32.totalorder %s8, 1
    %p67 = por %p65, %p66
    %p68 = scmp.ne.s32.totalorder %s60, %s63
    %p69 = scmp.eq.s32.totalorder %s8, 0
    %p70 = por %p68, %p69
    %p71 = scmp.ne.s32.totalorder %s60, %s63
    %p72 = scmp.eq.s32.totalorder %s13, 1
    %p73 = por %p71, %p72
    %p74 = scmp.ne.s32.totalorder %s63, %s64
    %p75 = scmp.eq.s32.totalorder %s13, 0
    %p76 = por %p74, %p75
    %p77 = scmp.ne.s32.totalorder %s63, %s64
    %p78 = scmp.eq.s32.totalorder %s14, 1
    %p79 = por %p77, %p78
    %p81 = scmp.ne.s32.totalorder %s64, %s80
    %p82 = scmp.eq.s32.totalorder %s14, 0
    %p83 = por %p81, %p82
    %s84 = ssub.s32 %s15, %s27
    %p85 = scmp.eq.s32.totalorder %s84, 0
    %s87 = sadd.s32 %s86, 1
    %s88 = scalar_select %p85, %s86, %s87
    %p91 = pneg %p85
    %p92 = scmp.eq.s32.totalorder %s8, 1
    %p93 = por %p91, %p92
    %p94 = scmp.ne.s32.totalorder %s86, %s89
    %p95 = scmp.eq.s32.totalorder %s8, 0
    %p96 = por %p94, %p95
    %p97 = scmp.ne.s32.totalorder %s86, %s89
    %p98 = scmp.eq.s32.totalorder %s13, 1
    %p99 = por %p97, %p98
    %p100 = scmp.ne.s32.totalorder %s89, %s90
    %p101 = scmp.eq.s32.totalorder %s13, 0
    %p102 = por %p100, %p101
    %p103 = scmp.ne.s32.totalorder %s89, %s90
    %p104 = scmp.eq.s32.totalorder %s14, 1
    %p105 = por %p103, %p104
    %p107 = scmp.ne.s32.totalorder %s90, %s106
    %p108 = scmp.eq.s32.totalorder %s14, 0
    %p109 = por %p107, %p108
    %p110 = scmp.le.s32.totalorder 1, %s8
    %p111 = scmp.lt.s32.totalorder %s8, 3
    %p112 = pnand %p110, %p111
    %p113 = pneg %p112
    // Predicated region
    $region9: #{wasserstein_loss.1} parent=5 // pred_check
      _
    $region10: #{wasserstein_loss.1} parent=5 // pred_check_branch
      %115 = sbr.rel (%p112) target = $region12
    $region11: #{wasserstein_loss.1} parent=5 // pred_region
      %s116 = ssub.s32 %s8, 1
    $region12: #{wasserstein_loss.1} parent=5 // pred_fallthru
      _
    %p117 = scmp.lt.s32.totalorder %s8, 2
    // Predicated region
    $region13: #{wasserstein_loss.1} parent=5 // pred_check
      %p118 = pneg %p117
    $region14: #{wasserstein_loss.1} parent=5 // pred_check_branch
      %120 = sbr.rel (%p118) target = $region16
    $region15: #{wasserstein_loss.1} parent=5 // pred_region
      // Predicated region
      $region17: #{wasserstein_loss.1} parent=15 // pred_check
        %p121 = pneg %p42
      $region18: #{wasserstein_loss.1} parent=15 // pred_check_branch
        %123 = sbr.rel (%p121) target = $region20
      $region19: #{wasserstein_loss.1} parent=15 // pred_region
        %p124 = scmp.lt.s32.totalorder %s15, 1
        %s125 = scalar_select %p124, %s15, 1
        %p126 = scmp.lt.s32.totalorder %s16, 0
        %s127 = scalar_select %p126, %s16, 0
        %s128 = sadd.s32 %s127, %s125
        %s129 = smul.addr %s128, 8
        %s130 = scalar_lea.vmem %s0, %s129
      $region20: #{wasserstein_loss.1} parent=15 // pred_fallthru
        _
      // Predicated region
      $region21: #{wasserstein_loss.1} parent=15 // pred_check
        %p131 = pneg %p70
      $region22: #{wasserstein_loss.1} parent=15 // pred_check_branch
        %133 = sbr.rel (%p131) target = $region24
      $region23: #{wasserstein_loss.1} parent=15 // pred_region
        %p134 = scmp.lt.s32.totalorder %s15, 1
        %s135 = scalar_select %p134, %s15, 1
        %p136 = scmp.lt.s32.totalorder %s16, 0
        %s137 = scalar_select %p136, %s16, 0
        %s138 = sadd.s32 %s137, %s135
        %s139 = smul.addr %s138, 8
        %s140 = scalar_lea.vmem %s1, %s139
      $region24: #{wasserstein_loss.1} parent=15 // pred_fallthru
        _
    $region16: #{wasserstein_loss.1} parent=5 // pred_fallthru
      _
    %p141 = scmp.le.s32.totalorder 1, %s8
    %p142 = scmp.lt.s32.totalorder %s8, 3
    %p143 = pnand %p141, %p142
    %p144 = pneg %p143
    // Predicated region
    $region25: #{wasserstein_loss.1} parent=5 // pred_check
      _
    $region26: #{wasserstein_loss.1} parent=5 // pred_check_branch
      %146 = sbr.rel (%p143) target = $region28
    $region27: #{wasserstein_loss.1} parent=5 // pred_region
      %s147 = ssub.s32 %s8, 1
      %p148 = scmp.lt.s32.totalorder %s17, 1
      %s149 = scalar_select %p148, %s17, 1
      %p150 = scmp.lt.s32.totalorder %s18, 0
      %s151 = scalar_select %p150, %s18, 0
      %s152 = sadd.s32 %s151, %s149
      %s153 = smul.addr %s152, 8
      %s154 = scalar_lea.vmem %s0, %s153
      %p155 = pneg %p48
      %p156 = pneg %p45
      %p157 = scmp.lt.s32.totalorder %s17, 1
      %s158 = scalar_select %p157, %s17, 1
      %p159 = scmp.lt.s32.totalorder %s18, 0
      %s160 = scalar_select %p159, %s18, 0
      %s161 = sadd.s32 %s160, %s158
      %s162 = smul.addr %s161, 8
      %s163 = scalar_lea.vmem %s1, %s162
      %p164 = pneg %p76
      %p165 = pneg %p73
      %p166 = pneg %p102
      %p167 = pneg %p99
      %p168 = scmp.lt.s32.totalorder %s17, 1
      %s169 = scalar_select %p168, %s17, 1
      %s170 = smul.addr %s169, 8
      %s171 = scalar_lea.vmem %s2, %s170
      %p172 = scmp.lt.s32.totalorder %s17, 1
      %s173 = scalar_select %p172, %s17, 1
      %p174 = scmp.lt.s32.totalorder %s18, 0
      %s175 = scalar_select %p174, %s18, 0
      %s176 = sadd.s32 %s175, %s173
      %s177 = smul.addr %s176, 8
      %s178 = scalar_lea.vmem %s0, %s177
      %p179 = scmp.lt.s32.totalorder %s17, 1
      %s180 = scalar_select %p179, %s17, 1
      %p181 = scmp.lt.s32.totalorder %s18, 0
      %s182 = scalar_select %p181, %s18, 0
      %s183 = sadd.s32 %s182, %s180
      %s184 = smul.addr %s183, 8
      %s185 = scalar_lea.vmem %s1, %s184
      %p186 = scmp.lt.s32.totalorder %s17, 1
      %s187 = scalar_select %p186, %s17, 1
      %s188 = smul.addr %s187, 8
      %s189 = scalar_lea.vmem %s2, %s188
      %p190 = scmp.eq.s32.totalorder %s18, 0
      // Predicated region
      $region29: #{wasserstein_loss.1} parent=27 // pred_check
        %p191 = pneg %p190
      $region30: #{wasserstein_loss.1} parent=27 // pred_check_branch
        %193 = sbr.rel (%p191) target = $region32
      $region31: #{wasserstein_loss.1} parent=27 // pred_region
        %194 = vst [vmem:[#allocation2] sm:$0xff] 0.0
      $region32: #{wasserstein_loss.1} parent=27 // pred_fallthru
        _
      %v195 = vld [vmem:[%s178] sm:$0xff]
      %v196 = vld [vmem:[%s185] sm:$0xff]
      %v197 = vmul.f32 %v195, %v196
      %v198 = vld [vmem:[#allocation2] sm:$0xff]
      %v199 = vadd.f32 %v197, 0.0
      %v200 = vadd.f32 %v198, %v199
      %201 = vst [vmem:[#allocation2] sm:$0xff] %v200
      // Predicated region
      $region33: #{wasserstein_loss.1} parent=27 // pred_check
        %p202 = pneg %p190
      $region34: #{wasserstein_loss.1} parent=27 // pred_check_branch
        %204 = sbr.rel (%p202) target = $region36
      $region35: #{wasserstein_loss.1} parent=27 // pred_region
        %v205 = vld [vmem:[#allocation2] sm:$0xff]
        %206 = vst [vmem:[%s189] sm:$0xff] %v205
      $region36: #{wasserstein_loss.1} parent=27 // pred_fallthru
        _
      %p207 = scmp.lt.s32.totalorder %s17, 1
      %s208 = scalar_select %p207, %s17, 1
      %s209 = smul.addr %s208, 8
      %s210 = scalar_lea.vmem %s2, %s209
      // Predicated region
      $region37: #{wasserstein_loss.1} parent=27 // pred_check
        %p211 = pneg %p99
      $region38: #{wasserstein_loss.1} parent=27 // pred_check_branch
        %213 = sbr.rel (%p211) target = $region40
      $region39: #{wasserstein_loss.1} parent=27 // pred_region
        _
      $region40: #{wasserstein_loss.1} parent=27 // pred_fallthru
        _
    $region28: #{wasserstein_loss.1} parent=5 // pred_fallthru
      _
    %p214 = scmp.le.s32.totalorder 2, %s8
    // Predicated region
    $region41: #{wasserstein_loss.1} parent=5 // pred_check
      %p215 = pneg %p214
    $region42: #{wasserstein_loss.1} parent=5 // pred_check_branch
      %217 = sbr.rel (%p215) target = $region44
    $region43: #{wasserstein_loss.1} parent=5 // pred_region
      %s218 = ssub.s32 %s8, 2
      // Predicated region
      $region45: #{wasserstein_loss.1} parent=43 // pred_check
        %p219 = pneg %p105
      $region46: #{wasserstein_loss.1} parent=43 // pred_check_branch
        %221 = sbr.rel (%p219) target = $region48
      $region47: #{wasserstein_loss.1} parent=43 // pred_region
        %p222 = scmp.lt.s32.totalorder %s19, 1
        %s223 = scalar_select %p222, %s19, 1
        %s224 = smul.addr %s223, 8
        %s225 = scalar_lea.vmem %s2, %s224
      $region48: #{wasserstein_loss.1} parent=43 // pred_fallthru
        _
    $region44: #{wasserstein_loss.1} parent=5 // pred_fallthru
      _
  $region6: #{wasserstein_loss.1} parent=0 // loop_footer
    %s12 = sadd.s32 1, %s8
  $region7: #{wasserstein_loss.1} parent=0 // loop_footer_branch
    %7 = sbr.rel target = $region3
  $region8: #{wasserstein_loss.1} parent=0 // loop_exit
    _

</llo_original>
